<compile_context>
chip_gen: v5e
topology: v5e:2x2
jax: 0.10.0
libtpu: 0.0.40
codegen_flags: <defaults>
</compile_context>

<pallas_src>
import jax
import jax.numpy as jnp
from jax.experimental import pallas as pl
from jax.experimental.pallas import tpu as pltpu

LANE = 128      # lane width: batch columns are padded/tiled to this
SUBLANE = 8     # f32 sublane quantum: action rows padded to this


def _round_up(x, m):
    return ((x + m - 1) // m) * m


def actor_kernel(sT_ref, w1_ref, b1_ref, w2_ref, b2_ref, w3_ref, b3_ref,
                 outT_ref):
    """One batch tile (batch on lanes) of the transposed Actor forward.

    out^T = tanh(W3 @ relu(W2 @ relu(W1 @ s^T + b1) + b2) + b3)

    Matmul inputs are bf16 (MXU-native on v5e/v6e/v7x), accumulation is f32,
    elementwise math stays f32.
    """
    # Layer 1: Linear + ReLU                         (hidden, tb)
    sT = sT_ref[...].astype(jnp.bfloat16)            # (state_dim, tb)
    x = jnp.dot(w1_ref[...], sT, preferred_element_type=jnp.float32)
    x = jnp.maximum(x + b1_ref[...], 0.0)

    # Layer 2: Linear + ReLU                         (hidden, tb)
    x = jnp.dot(w2_ref[...], x.astype(jnp.bfloat16),
                preferred_element_type=jnp.float32)
    x = jnp.maximum(x + b2_ref[...], 0.0)

    # Output layer: Linear + tanh                    (action_pad, tb)
    a = jnp.dot(w3_ref[...], x.astype(jnp.bfloat16),
                preferred_element_type=jnp.float32)
    outT_ref[...] = jnp.tanh(a + b3_ref[...]).astype(outT_ref.dtype)


def init_actor_params(key, state_dim, action_dim, hidden=64):
    """PyTorch Actor init: weight ~ N(0, 0.1), bias = 0.1.

    Weights use the PyTorch Linear layout (out_features, in_features).
    """
    k1, k2, k3 = jax.random.split(key, 3)
    w1 = 0.1 * jax.random.normal(k1, (hidden, state_dim), jnp.float32)
    b1 = jnp.full((hidden,), 0.1, jnp.float32)
    w2 = 0.1 * jax.random.normal(k2, (hidden, hidden), jnp.float32)
    b2 = jnp.full((hidden,), 0.1, jnp.float32)
    w3 = 0.1 * jax.random.normal(k3, (action_dim, hidden), jnp.float32)
    b3 = jnp.full((action_dim,), 0.1, jnp.float32)
    return w1, b1, w2, b2, w3, b3


def prepare_actor_params(w1, b1, w2, b2, w3, b3):
    """Pad the action rows to 8 sublanes, cast weights to bf16 once up front.

    Zero padding keeps the math exact: padded output rows see zero weights and
    zero bias, and are sliced off in the wrapper.  Biases become column
    vectors so they broadcast over the lane (batch) axis in the kernel.
    """
    action_dim, hidden = w3.shape
    action_p = _round_up(action_dim, SUBLANE)

    w3p = jnp.pad(w3, ((0, action_p - action_dim), (0, 0)))
    b3p = jnp.pad(b3, (0, action_p - action_dim))

    return dict(
        w1=w1.astype(jnp.bfloat16),
        b1=b1.reshape(-1, 1).astype(jnp.float32),
        w2=w2.astype(jnp.bfloat16),
        b2=b2.reshape(-1, 1).astype(jnp.float32),
        w3=w3p.astype(jnp.bfloat16),
        b3=b3p.reshape(-1, 1).astype(jnp.float32),
        action_dim=int(action_dim),
    )


def actor_forward(s, params, *, block_batch=1024):
    """Run the Actor forward pass. `params` comes from prepare_actor_params."""
    batch, state_dim = s.shape
    action_dim = params["action_dim"]
    action_p = params["w3"].shape[0]

    # Batch lives on the 128-wide lane axis of the transposed layout.
    block_batch = max(LANE, _round_up(block_batch, LANE))
    min_batch = _round_up(batch, LANE)
    if min_batch <= LANE:
        tb = LANE                                   # single tile; can't split
    else:
        # Keep the grid length >= 2 so the "parallel" batch axis shards over
        # both TensorCores on v7x; cap the tile at block_batch.
        tb = min(block_batch, _round_up(min_batch // 2, LANE))
    padded_batch = _round_up(batch, tb)
    grid = (padded_batch // tb,)

    # Transposed, zero-padded input: (state_dim, padded_batch), batch on lanes.
    sT = jnp.pad(s, ((0, padded_batch - batch), (0, 0))).T

    # Weights/biases: same block every iteration -> fetched once, VMEM-resident.
    resident = lambda arr: pl.BlockSpec(arr.shape, lambda i: (0, 0))

    outT = pl.pallas_call(
        actor_kernel,
        out_shape=jax.ShapeDtypeStruct((action_p, padded_batch), jnp.float32),
        grid=grid,
        in_specs=[
            pl.BlockSpec((state_dim, tb), lambda i: (0, i)),
            resident(params["w1"]), resident(params["b1"]),
            resident(params["w2"]), resident(params["b2"]),
            resident(params["w3"]), resident(params["b3"]),
        ],
        out_specs=pl.BlockSpec((action_p, tb), lambda i: (0, i)),
        compiler_params=pltpu.CompilerParams(
            dimension_semantics=("parallel",)),
    )(sT, params["w1"], params["b1"], params["w2"], params["b2"],
      params["w3"], params["b3"])

    # Small slice + transpose on the (action_p, padded_batch) output
    # (16x smaller than the old (padded_batch, 128) slab).
    return outT[:action_dim, :batch].T


def actor_reference(s, w1, b1, w2, b2, w3, b3):
    x = jnp.maximum(s @ w1.T + b1, 0.0)
    x = jnp.maximum(x @ w2.T + b2, 0.0)
    return jnp.tanh(x @ w3.T + b3)


if __name__ == "__main__":
    key = jax.random.PRNGKey(0)
    k_params, k_in1, k_in2 = jax.random.split(key, 3)

    state_dim, action_dim = 16, 4
    raw = init_actor_params(k_params, state_dim, action_dim)
    params = prepare_actor_params(*raw)

    # Small batch: single grid step.
    s_small = jax.random.normal(k_in1, (8, state_dim), jnp.float32)
    a_small = jax.block_until_ready(actor_forward(s_small, params))
    ref_small = actor_reference(s_small, *raw)
    assert a_small.shape == (8, action_dim)
    assert jnp.allclose(a_small, ref_small, atol=3e-2, rtol=3e-2), \
        "small-batch mismatch vs JAX reference"

    # Non-multiple batch: exercises the multi-step (parallel) grid + padding.
    s_big = jax.random.normal(k_in2, (260, state_dim), jnp.float32)
    a_big = jax.block_until_ready(actor_forward(s_big, params))
    ref_big = actor_reference(s_big, *raw)
    assert a_big.shape == (260, action_dim)
    assert jnp.allclose(a_big, ref_big, atol=3e-2, rtol=3e-2), \
        "tiled-batch mismatch vs JAX reference"

    print("KERNEL_OK")
</pallas_src>

<mosaic_0001>
module attributes {stable_mosaic.version = 11 : i64} {
  func.func @actor_kernel(%arg0: i32, %arg1: memref<16x128xf32, #tpu.memory_space<vmem>>, %arg2: memref<64x16xbf16, #tpu.memory_space<vmem>>, %arg3: memref<64x1xf32, #tpu.memory_space<vmem>>, %arg4: memref<64x64xbf16, #tpu.memory_space<vmem>>, %arg5: memref<64x1xf32, #tpu.memory_space<vmem>>, %arg6: memref<8x64xbf16, #tpu.memory_space<vmem>>, %arg7: memref<8x1xf32, #tpu.memory_space<vmem>>, %arg8: memref<8x128xf32, #tpu.memory_space<vmem>>) attributes {dimension_semantics = [#tpu.dimension_semantics<parallel>], iteration_bounds = array<i64: 1>, scalar_prefetch = 0 : i64, scratch_operands = 0 : i64, tpu.core_type = #tpu.core_type<tc>, window_params = [{transform_indices = @transform_0, window_bounds = array<i64: 16, 128>}, {pipeline_mode = #tpu.pipeline_mode<synchronous>, transform_indices = @transform_1, window_bounds = array<i64: 64, 16>}, {pipeline_mode = #tpu.pipeline_mode<synchronous>, transform_indices = @transform_2, window_bounds = array<i64: 64, 1>}, {pipeline_mode = #tpu.pipeline_mode<synchronous>, transform_indices = @transform_3, window_bounds = array<i64: 64, 64>}, {pipeline_mode = #tpu.pipeline_mode<synchronous>, transform_indices = @transform_4, window_bounds = array<i64: 64, 1>}, {pipeline_mode = #tpu.pipeline_mode<synchronous>, transform_indices = @transform_5, window_bounds = array<i64: 8, 64>}, {pipeline_mode = #tpu.pipeline_mode<synchronous>, transform_indices = @transform_6, window_bounds = array<i64: 8, 1>}, {transform_indices = @transform_7, window_bounds = array<i64: 8, 128>}]} {
    %c0 = arith.constant 0 : index
    %c0_0 = arith.constant 0 : index
    %0 = vector.load %arg1[%c0, %c0_0] : memref<16x128xf32, #tpu.memory_space<vmem>>, vector<16x128xf32>
    %1 = arith.truncf %0 : vector<16x128xf32> to vector<16x128xbf16>
    %c0_1 = arith.constant 0 : index
    %c0_2 = arith.constant 0 : index
    %2 = vector.load %arg2[%c0_1, %c0_2] : memref<64x16xbf16, #tpu.memory_space<vmem>>, vector<64x16xbf16>
    %cst = arith.constant dense<0.000000e+00> : vector<64x128xf32>
    %3 = tpu.matmul %2, %1, %cst {dimension_numbers = #tpu.dot_dimension_numbers<[1], [0], [0], [1], [0, 0, 1, 1], [], []>} : vector<64x16xbf16>, vector<16x128xbf16>, vector<64x128xf32> -> vector<64x128xf32>
    %c0_3 = arith.constant 0 : index
    %c0_4 = arith.constant 0 : index
    %4 = vector.load %arg3[%c0_3, %c0_4] : memref<64x1xf32, #tpu.memory_space<vmem>>, vector<64x1xf32>
    %5 = vector.broadcast %4 : vector<64x1xf32> to vector<64x128xf32>
    %6 = arith.addf %3, %5 : vector<64x128xf32>
    %cst_5 = arith.constant 0.000000e+00 : f32
    %7 = vector.broadcast %cst_5 : f32 to vector<64x128xf32>
    %8 = arith.maximumf %6, %7 : vector<64x128xf32>
    %c0_6 = arith.constant 0 : index
    %c0_7 = arith.constant 0 : index
    %9 = vector.load %arg4[%c0_6, %c0_7] : memref<64x64xbf16, #tpu.memory_space<vmem>>, vector<64x64xbf16>
    %10 = arith.truncf %8 : vector<64x128xf32> to vector<64x128xbf16>
    %cst_8 = arith.constant dense<0.000000e+00> : vector<64x128xf32>
    %11 = tpu.matmul %9, %10, %cst_8 {dimension_numbers = #tpu.dot_dimension_numbers<[1], [0], [0], [1], [0, 0, 1, 1], [], []>} : vector<64x64xbf16>, vector<64x128xbf16>, vector<64x128xf32> -> vector<64x128xf32>
    %c0_9 = arith.constant 0 : index
    %c0_10 = arith.constant 0 : index
    %12 = vector.load %arg5[%c0_9, %c0_10] : memref<64x1xf32, #tpu.memory_space<vmem>>, vector<64x1xf32>
    %13 = vector.broadcast %12 : vector<64x1xf32> to vector<64x128xf32>
    %14 = arith.addf %11, %13 : vector<64x128xf32>
    %cst_11 = arith.constant 0.000000e+00 : f32
    %15 = vector.broadcast %cst_11 : f32 to vector<64x128xf32>
    %16 = arith.maximumf %14, %15 : vector<64x128xf32>
    %c0_12 = arith.constant 0 : index
    %c0_13 = arith.constant 0 : index
    %17 = vector.load %arg6[%c0_12, %c0_13] : memref<8x64xbf16, #tpu.memory_space<vmem>>, vector<8x64xbf16>
    %18 = arith.truncf %16 : vector<64x128xf32> to vector<64x128xbf16>
    %cst_14 = arith.constant dense<0.000000e+00> : vector<8x128xf32>
    %19 = tpu.matmul %17, %18, %cst_14 {dimension_numbers = #tpu.dot_dimension_numbers<[1], [0], [0], [1], [0, 0, 1, 1], [], []>} : vector<8x64xbf16>, vector<64x128xbf16>, vector<8x128xf32> -> vector<8x128xf32>
    %c0_15 = arith.constant 0 : index
    %c0_16 = arith.constant 0 : index
    %20 = vector.load %arg7[%c0_15, %c0_16] : memref<8x1xf32, #tpu.memory_space<vmem>>, vector<8x1xf32>
    %21 = vector.broadcast %20 : vector<8x1xf32> to vector<8x128xf32>
    %22 = arith.addf %19, %21 : vector<8x128xf32>
    %23 = math.tanh %22 : vector<8x128xf32>
    %c0_17 = arith.constant 0 : index
    %c0_18 = arith.constant 0 : index
    %24 = vector.load %arg8[%c0_17, %c0_18] : memref<8x128xf32, #tpu.memory_space<vmem>>, vector<8x128xf32>
    tpu.vector_store %arg8[%c0_17, %c0_18], %23 {strides = array<i32>} : memref<8x128xf32, #tpu.memory_space<vmem>>, vector<8x128xf32>,
    return
  }
  func.func @transform_0(%arg0: i32) -> (i32, i32) {
    %c0_i32 = arith.constant 0 : i32
    %c0_i32_0 = arith.constant 0 : i32
    return %c0_i32, %arg0 : i32, i32
  }
  func.func @transform_1(%arg0: i32) -> (i32, i32) {
    %c0_i32 = arith.constant 0 : i32
    %c0_i32_0 = arith.constant 0 : i32
    %c0_i32_1 = arith.constant 0 : i32
    return %c0_i32, %c0_i32_0 : i32, i32
  }
  func.func @transform_2(%arg0: i32) -> (i32, i32) {
    %c0_i32 = arith.constant 0 : i32
    %c0_i32_0 = arith.constant 0 : i32
    %c0_i32_1 = arith.constant 0 : i32
    return %c0_i32, %c0_i32_0 : i32, i32
  }
  func.func @transform_3(%arg0: i32) -> (i32, i32) {
    %c0_i32 = arith.constant 0 : i32
    %c0_i32_0 = arith.constant 0 : i32
    %c0_i32_1 = arith.constant 0 : i32
    return %c0_i32, %c0_i32_0 : i32, i32
  }
  func.func @transform_4(%arg0: i32) -> (i32, i32) {
    %c0_i32 = arith.constant 0 : i32
    %c0_i32_0 = arith.constant 0 : i32
    %c0_i32_1 = arith.constant 0 : i32
    return %c0_i32, %c0_i32_0 : i32, i32
  }
  func.func @transform_5(%arg0: i32) -> (i32, i32) {
    %c0_i32 = arith.constant 0 : i32
    %c0_i32_0 = arith.constant 0 : i32
    %c0_i32_1 = arith.constant 0 : i32
    return %c0_i32, %c0_i32_0 : i32, i32
  }
  func.func @transform_6(%arg0: i32) -> (i32, i32) {
    %c0_i32 = arith.constant 0 : i32
    %c0_i32_0 = arith.constant 0 : i32
    %c0_i32_1 = arith.constant 0 : i32
    return %c0_i32, %c0_i32_0 : i32, i32
  }
  func.func @transform_7(%arg0: i32) -> (i32, i32) {
    %c0_i32 = arith.constant 0 : i32
    %c0_i32_0 = arith.constant 0 : i32
    return %c0_i32, %arg0 : i32, i32
  }
}

</mosaic_0001>

<llo_original>
// kernel: tpu_custom_call.1
$region0: #{tpu_custom_call.1}
  #allocation0 [shape = 'u32[]', space=smem, size = 0x4, offset = 0x4, fixed_abs, tag = 'smem constant byte address 0x4 - core index']
  #allocation1 [shape = 'u32[72,128]{1,0:T(1,128)}', space=vmem, size = 0x9000, scoped, tag = 'internal scratch']
  %s0 = inlined_call_operand.vmem [shape: f32[16,128], index: 0, kind: input, shape index: {}]
  %s1 = inlined_call_operand.vmem [shape: bf16[64,16], index: 1, kind: input, shape index: {}]
  %s2 = inlined_call_operand.vmem [shape: f32[64,1], index: 2, kind: input, shape index: {}]
  %s3 = inlined_call_operand.vmem [shape: bf16[64,64], index: 3, kind: input, shape index: {}]
  %s4 = inlined_call_operand.vmem [shape: f32[64,1], index: 4, kind: input, shape index: {}]
  %s5 = inlined_call_operand.vmem [shape: bf16[8,64], index: 5, kind: input, shape index: {}]
  %s6 = inlined_call_operand.vmem [shape: f32[8,1], index: 6, kind: input, shape index: {}]
  %s7 = inlined_call_operand.hbm [shape: f32[8,128], index: 7, kind: output, shape index: {}]
  %s8 = sld [smem:[#allocation0]]
  $region38: #{tpu_custom_call.1} parent=0
    _
  %s10 = ssub.s32 1, %s8
  %s11 = scalar_select 0, %s10, %s8
  $region1: #{tpu_custom_call.1} parent=0
    #allocation2 [shape = 'u8[4096]{0}', space=vmem, size = 0x1000, scoped, tag = 'output window, operand 0, single buffered']
    #allocation3 [shape = 's32[1]{0}', space=sflag, size = 0x4, scoped, tag = 'scoped memory for tpu_custom_call.1']
    %12 = vsyncpa [#allocation3], 0
    // Predicated region
    $region2: #{tpu_custom_call.1} parent=1 // pred_check
      _
    $region3: #{tpu_custom_call.1} parent=1 // pred_check_branch
      %14 = sbr.rel (0) target = $region5
    $region4: #{tpu_custom_call.1} parent=1 // pred_region
      _
    $region5: #{tpu_custom_call.1} parent=1 // pred_fallthru
      _
    // Predicated region
    $region6: #{tpu_custom_call.1} parent=1 // pred_check
      _
    $region7: #{tpu_custom_call.1} parent=1 // pred_check_branch
      %16 = sbr.rel (0) target = $region9
    $region8: #{tpu_custom_call.1} parent=1 // pred_region
      _
    $region9: #{tpu_custom_call.1} parent=1 // pred_fallthru
      _
    // Predicated region
    $region10: #{tpu_custom_call.1} parent=1 // pred_check
      _
    $region11: #{tpu_custom_call.1} parent=1 // pred_check_branch
      %18 = sbr.rel (0) target = $region13
    $region12: #{tpu_custom_call.1} parent=1 // pred_region
      _
    $region13: #{tpu_custom_call.1} parent=1 // pred_fallthru
      _
    // Predicated region
    $region14: #{tpu_custom_call.1} parent=1 // pred_check
      _
    $region15: #{tpu_custom_call.1} parent=1 // pred_check_branch
      %20 = sbr.rel (0) target = $region17
    $region16: #{tpu_custom_call.1} parent=1 // pred_region
      _
    $region17: #{tpu_custom_call.1} parent=1 // pred_fallthru
      _
    // Predicated region
    $region18: #{tpu_custom_call.1} parent=1 // pred_check
      _
    $region19: #{tpu_custom_call.1} parent=1 // pred_check_branch
      %22 = sbr.rel (0) target = $region21
    $region20: #{tpu_custom_call.1} parent=1 // pred_region
      _
    $region21: #{tpu_custom_call.1} parent=1 // pred_fallthru
      _
    // Predicated region
    $region22: #{tpu_custom_call.1} parent=1 // pred_check
      _
    $region23: #{tpu_custom_call.1} parent=1 // pred_check_branch
      %24 = sbr.rel (0) target = $region25
    $region24: #{tpu_custom_call.1} parent=1 // pred_region
      _
    $region25: #{tpu_custom_call.1} parent=1 // pred_fallthru
      _
    // Predicated region
    $region26: #{tpu_custom_call.1} parent=1 // pred_check
      _
    $region27: #{tpu_custom_call.1} parent=1 // pred_check_branch
      %26 = sbr.rel (0) target = $region29
    $region28: #{tpu_custom_call.1} parent=1 // pred_region
      _
    $region29: #{tpu_custom_call.1} parent=1 // pred_fallthru
      _
    %v28 = vld [vmem:[%s0] sm:$0xff]
    %v29 = vld [vmem:[%s0 + $0x8] sm:$0xff]
    %v30 = vpack.c.bf16 %v29, %v28
    %v31 = vld [vmem:[%s1] sm:$0xf]
    %v32 = vld [vmem:[%s1 + $0x4] sm:$0xf]
    %v33 = vld [vmem:[%s1 + $0x8] sm:$0xf]
    %v34 = vld [vmem:[%s1 + $0xc] sm:$0xf]
    %v35 = vld [vmem:[%s1 + $0x10] sm:$0xf]
    %v36 = vld [vmem:[%s1 + $0x14] sm:$0xf]
    %v37 = vld [vmem:[%s1 + $0x18] sm:$0xf]
    %v38 = vld [vmem:[%s1 + $0x1c] sm:$0xf]
    %v39 = vld [vmem:[%s2] sm:$0xff]
    %v40 = vld [vmem:[%s2 + $0x8] sm:$0xff]
    %v41 = vld [vmem:[%s2 + $0x10] sm:$0xff]
    %v42 = vld [vmem:[%s2 + $0x18] sm:$0xff]
    %v43 = vld [vmem:[%s2 + $0x20] sm:$0xff]
    %v44 = vld [vmem:[%s2 + $0x28] sm:$0xff]
    %v45 = vld [vmem:[%s2 + $0x30] sm:$0xff]
    %v46 = vld [vmem:[%s2 + $0x38] sm:$0xff]
    %48 = vset.pattern.permute.xlu0 0
    %49 = vperm.xlu0 %48, %v39
    %v50 = vpop.permute.xlu0 %49
    %53 = vset.pattern.permute.xlu0 0
    %54 = vperm.xlu0 %53, %v40
    %v55 = vpop.permute.xlu0 %54
    %58 = vset.pattern.permute.xlu0 0
    %59 = vperm.xlu0 %58, %v41
    %v60 = vpop.permute.xlu0 %59
    %63 = vset.pattern.permute.xlu0 0
    %64 = vperm.xlu0 %63, %v42
    %v65 = vpop.permute.xlu0 %64
    %68 = vset.pattern.permute.xlu0 0
    %69 = vperm.xlu0 %68, %v43
    %v70 = vpop.permute.xlu0 %69
    %73 = vset.pattern.permute.xlu0 0
    %74 = vperm.xlu0 %73, %v44
    %v75 = vpop.permute.xlu0 %74
    %78 = vset.pattern.permute.xlu0 0
    %79 = vperm.xlu0 %78, %v45
    %v80 = vpop.permute.xlu0 %79
    %83 = vset.pattern.permute.xlu0 0
    %84 = vperm.xlu0 %83, %v46
    %v85 = vpop.permute.xlu0 %84
    %v95 = vunpack.c.l.b16 %v31
    %v96 = vunpack.c.l.b16 %v32
    %v97 = vunpack.c.l.b16 %v33
    %v98 = vunpack.c.l.b16 %v34
    %v99 = vunpack.c.l.b16 %v35
    %v100 = vunpack.c.l.b16 %v36
    %v101 = vunpack.c.l.b16 %v37
    %v102 = vunpack.c.l.b16 %v38
    %v103 = vpack.c.b16 %v96, %v95
    %v104 = vpack.c.b16 %v98, %v97
    %v105 = vpack.c.b16 %v100, %v99
    %v106 = vpack.c.b16 %v102, %v101
    %vm107 = vcmask 130048
    %v109 = vsel %vm107, %v103, 0
    %v112 = vsel %vm107, %v104, 0
    %v115 = vsel %vm107, %v105, 0
    %v118 = vsel %vm107, %v106, 0
    %120 = vmatpush.bf16.msra.mxu0 0
    %121 = vmatpush.bf16.msra.mxu0 0
    %122 = vmatpush.bf16.msra.mxu0 0
    %123 = vmatpush.bf16.msra.mxu0 0
    %124 = vmatpush.bf16.msra.mxu0 0
    %125 = vmatpush.bf16.msra.mxu0 0
    %126 = vmatpush.bf16.msra.mxu0 0
    %127 = vmatpush.bf16.msra.mxu0 %v30
    %128 = vmatmul.bf16.gmra.mxu0 %v109
    %v129 = vpop.f32.mrf.mxu0
    %v130 = vadd.f32 %v50, %v129
    %v131 = vpop.f32.mrf.mxu0
    %v132 = vadd.f32 %v55, %v131
    %133 = vmatmul.bf16.gmra.mxu0 %v112
    %v134 = vpop.f32.mrf.mxu0
    %v135 = vadd.f32 %v60, %v134
    %v136 = vpop.f32.mrf.mxu0
    %v137 = vadd.f32 %v65, %v136
    %138 = vmatmul.bf16.gmra.mxu0 %v115
    %v139 = vpop.f32.mrf.mxu0
    %v140 = vadd.f32 %v70, %v139
    %v141 = vpop.f32.mrf.mxu0
    %v142 = vadd.f32 %v75, %v141
    %143 = vmatmul.bf16.gmra.mxu0 %v118
    %v144 = vpop.f32.mrf.mxu0
    %v145 = vadd.f32 %v80, %v144
    %v146 = vpop.f32.mrf.mxu0
    %v147 = vadd.f32 %v85, %v146
    %148 = vdwg.mxu0
    %v149 = vmax.f32 %v130, 0.0
    %v150 = vmax.f32 %v132, 0.0
    %v151 = vmax.f32 %v135, 0.0
    %v152 = vmax.f32 %v137, 0.0
    %v153 = vmax.f32 %v140, 0.0
    %v154 = vmax.f32 %v142, 0.0
    %v155 = vmax.f32 %v145, 0.0
    %v156 = vmax.f32 %v147, 0.0
    %v157 = vld [vmem:[%s3] sm:$0xf]
    %v158 = vld [vmem:[%s3 + $0x4] sm:$0xf]
    %v159 = vld [vmem:[%s3 + $0x8] sm:$0xf]
    %v160 = vld [vmem:[%s3 + $0xc] sm:$0xf]
    %v161 = vld [vmem:[%s3 + $0x10] sm:$0xf]
    %v162 = vld [vmem:[%s3 + $0x14] sm:$0xf]
    %v163 = vld [vmem:[%s3 + $0x18] sm:$0xf]
    %v164 = vld [vmem:[%s3 + $0x1c] sm:$0xf]
    %v165 = vpack.c.bf16 %v150, %v149
    %v166 = vpack.c.bf16 %v152, %v151
    %v167 = vpack.c.bf16 %v154, %v153
    %v168 = vpack.c.bf16 %v156, %v155
    %v169 = vld [vmem:[%s4] sm:$0xff]
    %v170 = vld [vmem:[%s4 + $0x8] sm:$0xff]
    %v171 = vld [vmem:[%s4 + $0x10] sm:$0xff]
    %v172 = vld [vmem:[%s4 + $0x18] sm:$0xff]
    %v173 = vld [vmem:[%s4 + $0x20] sm:$0xff]
    %v174 = vld [vmem:[%s4 + $0x28] sm:$0xff]
    %v175 = vld [vmem:[%s4 + $0x30] sm:$0xff]
    %v176 = vld [vmem:[%s4 + $0x38] sm:$0xff]
    %178 = vset.pattern.permute.xlu0 0
    %179 = vperm.xlu0 %178, %v169
    %v180 = vpop.permute.xlu0 %179
    %183 = vset.pattern.permute.xlu0 0
    %184 = vperm.xlu0 %183, %v170
    %v185 = vpop.permute.xlu0 %184
    %188 = vset.pattern.permute.xlu0 0
    %189 = vperm.xlu0 %188, %v171
    %v190 = vpop.permute.xlu0 %189
    %193 = vset.pattern.permute.xlu0 0
    %194 = vperm.xlu0 %193, %v172
    %v195 = vpop.permute.xlu0 %194
    %198 = vset.pattern.permute.xlu0 0
    %199 = vperm.xlu0 %198, %v173
    %v200 = vpop.permute.xlu0 %199
    %203 = vset.pattern.permute.xlu0 0
    %204 = vperm.xlu0 %203, %v174
    %v205 = vpop.permute.xlu0 %204
    %208 = vset.pattern.permute.xlu0 0
    %209 = vperm.xlu0 %208, %v175
    %v210 = vpop.permute.xlu0 %209
    %213 = vset.pattern.permute.xlu0 0
    %214 = vperm.xlu0 %213, %v176
    %v215 = vpop.permute.xlu0 %214
    %v225 = vunpack.c.l.b16 %v157
    %v226 = vunpack.c.l.b16 %v158
    %v227 = vunpack.c.l.b16 %v159
    %v228 = vunpack.c.l.b16 %v160
    %v229 = vunpack.c.l.b16 %v161
    %v230 = vunpack.c.l.b16 %v162
    %v231 = vunpack.c.l.b16 %v163
    %v232 = vunpack.c.l.b16 %v164
    %v233 = vpack.c.b16 %v226, %v225
    %v234 = vpack.c.b16 %v228, %v227
    %v235 = vpack.c.b16 %v230, %v229
    %v236 = vpack.c.b16 %v232, %v231
    %vm237 = vcmask 523264
    %v239 = vsel %vm237, %v233, 0
    %v242 = vsel %vm237, %v234, 0
    %v245 = vsel %vm237, %v235, 0
    %v248 = vsel %vm237, %v236, 0
    %250 = vmatpush.bf16.msra.mxu0 0
    %251 = vmatpush.bf16.msra.mxu0 0
    %252 = vmatpush.bf16.msra.mxu0 0
    %253 = vmatpush.bf16.msra.mxu0 0
    %254 = vmatpush.bf16.msra.mxu0 %v168
    %255 = vmatpush.bf16.msra.mxu0 %v167
    %256 = vmatpush.bf16.msra.mxu0 %v166
    %257 = vmatpush.bf16.msra.mxu0 %v165
    %258 = vmatmul.bf16.gmra.mxu0 %v239
    %v259 = vpop.f32.mrf.mxu0
    %v260 = vadd.f32 %v180, %v259
    %v261 = vpop.f32.mrf.mxu0
    %v262 = vadd.f32 %v185, %v261
    %263 = vmatmul.bf16.gmra.mxu0 %v242
    %v264 = vpop.f32.mrf.mxu0
    %v265 = vadd.f32 %v190, %v264
    %v266 = vpop.f32.mrf.mxu0
    %v267 = vadd.f32 %v195, %v266
    %268 = vmatmul.bf16.gmra.mxu0 %v245
    %v269 = vpop.f32.mrf.mxu0
    %v270 = vadd.f32 %v200, %v269
    %v271 = vpop.f32.mrf.mxu0
    %v272 = vadd.f32 %v205, %v271
    %273 = vmatmul.bf16.gmra.mxu0 %v248
    %v274 = vpop.f32.mrf.mxu0
    %v275 = vadd.f32 %v210, %v274
    %v276 = vpop.f32.mrf.mxu0
    %v277 = vadd.f32 %v215, %v276
    %278 = vdwg.mxu0
    %v279 = vmax.f32 %v260, 0.0
    %v280 = vmax.f32 %v262, 0.0
    %v281 = vmax.f32 %v265, 0.0
    %v282 = vmax.f32 %v267, 0.0
    %v283 = vmax.f32 %v270, 0.0
    %v284 = vmax.f32 %v272, 0.0
    %v285 = vmax.f32 %v275, 0.0
    %v286 = vmax.f32 %v277, 0.0
    %v287 = vld [vmem:[%s5] sm:$0xf]
    %v288 = vpack.c.bf16 %v280, %v279
    %v289 = vpack.c.bf16 %v282, %v281
    %v290 = vpack.c.bf16 %v284, %v283
    %v291 = vpack.c.bf16 %v286, %v285
    %v292 = vld [vmem:[%s6] sm:$0xff]
    %294 = vset.pattern.permute.xlu0 0
    %295 = vperm.xlu0 %294, %v292
    %v296 = vpop.permute.xlu0 %295
    %v299 = vsel %vm237, %v287, 0
    %301 = vmatpush.bf16.msra.mxu0 0
    %302 = vmatpush.bf16.msra.mxu0 0
    %303 = vmatpush.bf16.msra.mxu0 0
    %304 = vmatpush.bf16.msra.mxu0 0
    %305 = vmatpush.bf16.msra.mxu0 %v291
    %306 = vmatpush.bf16.msra.mxu0 %v290
    %307 = vmatpush.bf16.msra.mxu0 %v289
    %308 = vmatpush.bf16.msra.mxu0 %v288
    %309 = vmatmul.bf16.gmra.mxu0 %v299
    %v310 = vpop.f32.mrf.mxu0
    %v311 = vadd.f32 %v296, %v310
    %v312 = vpop.f32.mrf.mxu0
    %313 = vdwg.mxu0
    %v314 = vtanh.pop %v311
    %315 = vst [vmem:[#allocation2] sm:$0xff] %v314
    // Predicated region
    $region30: #{tpu_custom_call.1} parent=1 // pred_check
      _
    $region31: #{tpu_custom_call.1} parent=1 // pred_check_branch
      %317 = sbr.rel (0) target = $region33
    $region32: #{tpu_custom_call.1} parent=1 // pred_region
      %319 = vsyncadd [#allocation3], 0
      %s321 = sshll.u32 [#allocation2], 4
      %s322 = int_to_ptr.vmem [resolvable:$true] %s321
      %s323 = sshll.u32 %s7, 4
      %s324 = int_to_ptr.hbm [resolvable:$true] %s323
      %326 = dma.vmem_to_hbm [thread:$0]  %s322, 128, %s324, [#allocation3]
    $region33: #{tpu_custom_call.1} parent=1 // pred_fallthru
      _
    // Predicated region
    $region34: #{tpu_custom_call.1} parent=1 // pred_check
      _
    $region35: #{tpu_custom_call.1} parent=1 // pred_check_branch
      %328 = sbr.rel (0) target = $region37
    $region36: #{tpu_custom_call.1} parent=1 // pred_region
      %330 = dma.done [#allocation3], 128
    $region37: #{tpu_custom_call.1} parent=1 // pred_fallthru
      _
    %331 = vsyncpa [#allocation3], 1

</llo_original>
